<compile_context>
chip_gen: v7x
topology: tpu7x:2x2x1
jax: 0.10.0
libtpu: 0.0.40
codegen_flags: <defaults>
</compile_context>

<pallas_src>
import jax
import jax.numpy as jnp
from jax.experimental import pallas as pl
from jax.experimental.pallas import tpu as pltpu


_VMEM_TARGET_BYTES = 36 * 1024 * 1024   # estimated working set we aim for
_VMEM_LIMIT_BYTES = 48 * 1024 * 1024    # scoped limit: safe on v7x (64 MiB physical)
                                        # and v5e/v6e (128 MiB); the 16/32 MiB default
                                        # scoped limits would otherwise reject big tiles.


def _round_up(x, m):
    return ((x + m - 1) // m) * m


def _block_vmem_bytes(outer, sub, lane, itemsize):
    """VMEM footprint of one (outer, sub, lane) block incl. (sublane, 128-lane) padding."""
    sub_mult = max(8, 32 // itemsize)            # 8 sublanes/f32 tile, 16/bf16, 32/int8
    return outer * _round_up(max(sub, 1), sub_mult) * _round_up(max(lane, 1), 128) * itemsize


def _vmem_estimate(tb, tn, B, N, D, itemsize, rb, rn):
    """Conservative VMEM estimate for (tb, tn, D) blocks: h/t/r/out double-buffered
    plus headroom for f32 element-wise intermediates the compiler may materialize."""
    h_blk = _block_vmem_bytes(tb, tn, D, itemsize)
    t_blk = h_blk
    if rn == N:                                   # r streams like h/t (3rd full stream)
        r_blk = _block_vmem_bytes(tb if rb == B else 1, tn, D, itemsize)
    else:                                         # compact r: (tb_r, 1, D) block
        r_blk = _block_vmem_bytes(tb if rb == B else 1, 1, D, itemsize)
    out_blk = _block_vmem_bytes(tb, tn, 1, 4)     # worst case: (tb, tn, 1) column layout
    pipelined = 2 * (h_blk + t_blk + r_blk + out_blk)       # double buffering
    temps = 3 * tb * _round_up(tn, 8) * _round_up(D, 128) * 4
    return pipelined + temps


def _choose_tiles(B, N, D, itemsize, rb, rn):
    """Return (TB, TN, lane_dense_out_ok).  No fixed row cap: tiles are sized purely
    on (padded) bytes so each grid step streams multi-MiB blocks."""
    def est(tb, tn):
        return _vmem_estimate(tb, tn, B, N, D, itemsize, rb, rn)

    if est(1, N) <= _VMEM_TARGET_BYTES:
        # --- full-N tiles; grow the batch tile TB (packs many batches per step). ---
        if B <= 8:
            if est(B, N) <= _VMEM_TARGET_BYTES:
                return B, N, True
            tb = 1
            while tb + 1 < B and est(tb + 1, N) <= _VMEM_TARGET_BYTES:
                tb += 1
            return tb, N, False
        if est(8, N) > _VMEM_TARGET_BYTES:
            tb = 1
            while tb + 1 < 8 and est(tb + 1, N) <= _VMEM_TARGET_BYTES:
                tb += 1
            return tb, N, False
        tb = 8
        while tb < B:
            cand = min(B, tb * 2)
            if est(cand, N) <= _VMEM_TARGET_BYTES:
                tb = cand
            else:
                break
        if tb < B:                                # refine over multiples of 8
            lo, hi = tb, min(B, tb * 2)
            while hi - lo > 8:
                mid = ((lo + hi) // 2) // 8 * 8
                if mid <= lo:
                    break
                if est(mid, N) <= _VMEM_TARGET_BYTES:
                    lo = mid
                else:
                    hi = mid
            tb = lo
        if tb == B and B >= 16:
            # keep >= 2 grid steps so both v7x TensorCores get work
            tb = max(8, ((B + 1) // 2) // 8 * 8)
        return tb, N, (tb == B or tb % 8 == 0)

    # --- a single batch row already exceeds the budget: TB = 1, tile along N. ---
    tn = 8
    while tn < N:
        cand = min(N, tn * 2)
        if est(1, cand) <= _VMEM_TARGET_BYTES:
            tn = cand
        else:
            break
    if tn < N:
        lo, hi = tn, min(N, tn * 2)
        while hi - lo > 8:
            mid = ((lo + hi) // 2) // 8 * 8
            if mid <= lo:
                break
            if est(1, mid) <= _VMEM_TARGET_BYTES:
                lo = mid
            else:
                hi = mid
        tn = lo
    return 1, tn, False


def _score_kernel(h_ref, r_ref, t_ref, out_ref):
    # Blocks: h/t (TB, TN, D); r (TB or 1, 1 or TN, D) -- broadcasts in-kernel;
    # out is (TB, TN) (lane-dense) or (TB, TN, 1) (column), always float32.
    # The difference is taken in the input dtype (native bf16 VALU on v6e/v7x);
    # the square-accumulate and sqrt run in f32.
    d = (h_ref[...] + r_ref[...] - t_ref[...]).astype(jnp.float32)
    if len(out_ref.shape) == 2:
        sq = jnp.sum(d * d, axis=-1)                    # (TB, TN)  lane-dense store
    else:
        sq = jnp.sum(d * d, axis=-1, keepdims=True)     # (TB, TN, 1)
    out_ref[...] = (-jnp.sqrt(sq)).astype(out_ref.dtype)


def embedding_learner_forward(h, t, r, pos_num):
    """Pallas implementation of EmbeddingLearner.forward.

    h, t: [B, N, 1, D]; r broadcastable to h (e.g. [B, 1, 1, D]).
    Returns (p_score [B, pos_num], n_score [B, N - pos_num]) in float32
    (accumulation is f32; returning f32 avoids a lossy final downcast for bf16 inputs).
    """
    B, N, one, D = h.shape
    assert one == 1, "dim 2 must be size 1 (it is squeezed, as in the torch module)"
    assert t.shape == h.shape
    assert r.ndim == 4 and r.shape[2] == 1 and r.shape[3] == D
    rb, rn = r.shape[0], r.shape[1]
    assert rb in (1, B) and rn in (1, N), "r must be broadcastable to h"

    h3 = h.reshape(B, N, D)
    t3 = t.reshape(B, N, D)
    r3 = r.reshape(rb, rn, D)        # compact; never broadcast to [B, N, D] in HBM

    itemsize = jnp.dtype(h.dtype).itemsize
    TB, TN, out_2d = _choose_tiles(B, N, D, itemsize, rb, rn)
    grid = (pl.cdiv(B, TB), pl.cdiv(N, TN))

    h_spec = pl.BlockSpec((TB, TN, D), lambda b, n: (b, n, 0))
    t_spec = pl.BlockSpec((TB, TN, D), lambda b, n: (b, n, 0))
    rb_blk = TB if rb == B else 1
    if rn == 1:
        r_spec = pl.BlockSpec(
            (rb_blk, 1, D),
            (lambda b, n: (b, 0, 0)) if rb == B else (lambda b, n: (0, 0, 0)))
    else:
        r_spec = pl.BlockSpec(
            (rb_blk, TN, D),
            (lambda b, n: (b, n, 0)) if rb == B else (lambda b, n: (0, n, 0)))

    params = pltpu.CompilerParams(
        dimension_semantics=("parallel", "parallel"),
        vmem_limit_bytes=_VMEM_LIMIT_BYTES,
    )

    def run(lane_dense_out):
        if lane_dense_out:
            out_shape = jax.ShapeDtypeStruct((B, N), jnp.float32)
            out_spec = pl.BlockSpec((TB, N), lambda b, n: (b, n))
        else:
            out_shape = jax.ShapeDtypeStruct((B, N, 1), jnp.float32)
            out_spec = pl.BlockSpec((TB, TN, 1), lambda b, n: (b, n, 0))
        out = pl.pallas_call(
            _score_kernel,
            out_shape=out_shape,
            grid=grid,
            in_specs=[h_spec, r_spec, t_spec],
            out_specs=out_spec,
            compiler_params=params,
        )(h3, r3, t3)
        if isinstance(out, jax.Array):
            jax.block_until_ready(out)   # surface any deferred error inside try/except
        return out if lane_dense_out else out.reshape(B, N)

    if out_2d:
        try:
            score = run(True)
        except Exception:
            # The lane-dense (TB, N) store needs a cross-tile relayout of the row
            # reduction; if this toolchain rejects it, fall back to the
            # always-supported (TB, TN, 1) column layout (still budgeted for).
            score = run(False)
    else:
        score = run(False)

    p_score = score[:, :pos_num]
    n_score = score[:, pos_num:]
    return p_score, n_score


if __name__ == "__main__":
    # Small deterministic example: B=2 tasks, N=8 candidate triples,
    # D=32 embedding dim, pos_num=3 positives per task.
    B, N, D = 2, 8, 32
    pos_num = 3

    key = jax.random.PRNGKey(0)
    kh, kt, kr = jax.random.split(key, 3)
    h = jax.random.normal(kh, (B, N, 1, D), dtype=jnp.float32)
    t = jax.random.normal(kt, (B, N, 1, D), dtype=jnp.float32)
    # r is a per-task relation embedding broadcast across candidates.
    r = jax.random.normal(kr, (B, 1, 1, D), dtype=jnp.float32)

    p_score, n_score = embedding_learner_forward(h, t, r, pos_num)
    jax.block_until_ready((p_score, n_score))

    # Reference check in plain JAX (matches torch.norm(..., 2, -1).squeeze(2)).
    ref = -jnp.linalg.norm(h + r - t, ord=2, axis=-1).squeeze(2)
    assert p_score.shape == (B, pos_num)
    assert n_score.shape == (B, N - pos_num)
    assert jnp.allclose(p_score, ref[:, :pos_num], atol=1e-5, rtol=1e-5)
    assert jnp.allclose(n_score, ref[:, pos_num:], atol=1e-5, rtol=1e-5)

    print("KERNEL_OK")
</pallas_src>

<mosaic_0001>
module attributes {stable_mosaic.version = 11 : i64} {
  func.func @_score_kernel(%arg0: i32, %arg1: i32, %arg2: memref<2x8x32xf32, #tpu.memory_space<vmem>>, %arg3: memref<2x1x32xf32, #tpu.memory_space<vmem>>, %arg4: memref<2x8x32xf32, #tpu.memory_space<vmem>>, %arg5: memref<2x8xf32, #tpu.memory_space<vmem>>) attributes {dimension_semantics = [#tpu.dimension_semantics<parallel>, #tpu.dimension_semantics<parallel>], iteration_bounds = array<i64: 1, 1>, scalar_prefetch = 0 : i64, scratch_operands = 0 : i64, tpu.core_type = #tpu.core_type<tc>, window_params = [{transform_indices = @transform_0, window_bounds = array<i64: 2, 8, 32>}, {transform_indices = @transform_1, window_bounds = array<i64: 2, 1, 32>}, {transform_indices = @transform_2, window_bounds = array<i64: 2, 8, 32>}, {transform_indices = @transform_3, window_bounds = array<i64: 2, 8>}]} {
    %c0 = arith.constant 0 : index
    %c0_0 = arith.constant 0 : index
    %c0_1 = arith.constant 0 : index
    %0 = vector.load %arg2[%c0, %c0_0, %c0_1] : memref<2x8x32xf32, #tpu.memory_space<vmem>>, vector<2x8x32xf32>
    %c0_2 = arith.constant 0 : index
    %c0_3 = arith.constant 0 : index
    %c0_4 = arith.constant 0 : index
    %1 = vector.load %arg3[%c0_2, %c0_3, %c0_4] : memref<2x1x32xf32, #tpu.memory_space<vmem>>, vector<2x1x32xf32>
    %2 = vector.broadcast %1 : vector<2x1x32xf32> to vector<2x8x32xf32>
    %3 = arith.addf %0, %2 : vector<2x8x32xf32>
    %c0_5 = arith.constant 0 : index
    %c0_6 = arith.constant 0 : index
    %c0_7 = arith.constant 0 : index
    %4 = vector.load %arg4[%c0_5, %c0_6, %c0_7] : memref<2x8x32xf32, #tpu.memory_space<vmem>>, vector<2x8x32xf32>
    %5 = arith.subf %3, %4 : vector<2x8x32xf32>
    %6 = arith.mulf %5, %5 : vector<2x8x32xf32>
    %cst = arith.constant dense<0.000000e+00> : vector<2x8xf32>
    %7 = vector.multi_reduction <add>, %6, %cst [2] : vector<2x8x32xf32> to vector<2x8xf32>
    %8 = math.sqrt %7 : vector<2x8xf32>
    %cst_8 = arith.constant 0.000000e+00 : f32
    %9 = vector.broadcast %cst_8 : f32 to vector<2x8xf32>
    %10 = arith.subf %9, %8 : vector<2x8xf32>
    %c0_9 = arith.constant 0 : index
    %c0_10 = arith.constant 0 : index
    %11 = vector.load %arg5[%c0_9, %c0_10] : memref<2x8xf32, #tpu.memory_space<vmem>>, vector<2x8xf32>
    tpu.vector_store %arg5[%c0_9, %c0_10], %10 {strides = array<i32>} : memref<2x8xf32, #tpu.memory_space<vmem>>, vector<2x8xf32>,
    return
  }
  func.func @transform_0(%arg0: i32, %arg1: i32) -> (i32, i32, i32) {
    %c0_i32 = arith.constant 0 : i32
    %c0_i32_0 = arith.constant 0 : i32
    return %arg0, %arg1, %c0_i32 : i32, i32, i32
  }
  func.func @transform_1(%arg0: i32, %arg1: i32) -> (i32, i32, i32) {
    %c0_i32 = arith.constant 0 : i32
    %c0_i32_0 = arith.constant 0 : i32
    %c0_i32_1 = arith.constant 0 : i32
    return %arg0, %c0_i32, %c0_i32_0 : i32, i32, i32
  }
  func.func @transform_2(%arg0: i32, %arg1: i32) -> (i32, i32, i32) {
    %c0_i32 = arith.constant 0 : i32
    %c0_i32_0 = arith.constant 0 : i32
    return %arg0, %arg1, %c0_i32 : i32, i32, i32
  }
  func.func @transform_3(%arg0: i32, %arg1: i32) -> (i32, i32) {
    %c0_i32 = arith.constant 0 : i32
    return %arg0, %arg1 : i32, i32
  }
}

module attributes {stable_mosaic.version = 11 : i64} {
  func.func @_score_kernel(%arg0: i32, %arg1: i32, %arg2: memref<2x8x32xf32, #tpu.memory_space<vmem>>, %arg3: memref<2x1x32xf32, #tpu.memory_space<vmem>>, %arg4: memref<2x8x32xf32, #tpu.memory_space<vmem>>, %arg5: memref<2x8x1xf32, #tpu.memory_space<vmem>>) attributes {dimension_semantics = [#tpu.dimension_semantics<parallel>, #tpu.dimension_semantics<parallel>], iteration_bounds = array<i64: 1, 1>, scalar_prefetch = 0 : i64, scratch_operands = 0 : i64, tpu.core_type = #tpu.core_type<tc>, window_params = [{transform_indices = @transform_0, window_bounds = array<i64: 2, 8, 32>}, {transform_indices = @transform_1, window_bounds = array<i64: 2, 1, 32>}, {transform_indices = @transform_2, window_bounds = array<i64: 2, 8, 32>}, {transform_indices = @transform_3, window_bounds = array<i64: 2, 8, 1>}]} {
    %c0 = arith.constant 0 : index
    %c0_0 = arith.constant 0 : index
    %c0_1 = arith.constant 0 : index
    %0 = vector.load %arg2[%c0, %c0_0, %c0_1] : memref<2x8x32xf32, #tpu.memory_space<vmem>>, vector<2x8x32xf32>
    %c0_2 = arith.constant 0 : index
    %c0_3 = arith.constant 0 : index
    %c0_4 = arith.constant 0 : index
    %1 = vector.load %arg3[%c0_2, %c0_3, %c0_4] : memref<2x1x32xf32, #tpu.memory_space<vmem>>, vector<2x1x32xf32>
    %2 = vector.broadcast %1 : vector<2x1x32xf32> to vector<2x8x32xf32>
    %3 = arith.addf %0, %2 : vector<2x8x32xf32>
    %c0_5 = arith.constant 0 : index
    %c0_6 = arith.constant 0 : index
    %c0_7 = arith.constant 0 : index
    %4 = vector.load %arg4[%c0_5, %c0_6, %c0_7] : memref<2x8x32xf32, #tpu.memory_space<vmem>>, vector<2x8x32xf32>
    %5 = arith.subf %3, %4 : vector<2x8x32xf32>
    %6 = arith.mulf %5, %5 : vector<2x8x32xf32>
    %cst = arith.constant dense<0.000000e+00> : vector<2x8xf32>
    %7 = vector.multi_reduction <add>, %6, %cst [2] : vector<2x8x32xf32> to vector<2x8xf32>
    %8 = vector.shape_cast %7 : vector<2x8xf32> to vector<2x8x1xf32>
    %9 = math.sqrt %8 : vector<2x8x1xf32>
    %cst_8 = arith.constant 0.000000e+00 : f32
    %10 = vector.broadcast %cst_8 : f32 to vector<2x8x1xf32>
    %11 = arith.subf %10, %9 : vector<2x8x1xf32>
    %c0_9 = arith.constant 0 : index
    %c0_10 = arith.constant 0 : index
    %c0_11 = arith.constant 0 : index
    %12 = vector.load %arg5[%c0_9, %c0_10, %c0_11] : memref<2x8x1xf32, #tpu.memory_space<vmem>>, vector<2x8x1xf32>
    tpu.vector_store %arg5[%c0_9, %c0_10, %c0_11], %11 {strides = array<i32>} : memref<2x8x1xf32, #tpu.memory_space<vmem>>, vector<2x8x1xf32>,
    return
  }
  func.func @transform_0(%arg0: i32, %arg1: i32) -> (i32, i32, i32) {
    %c0_i32 = arith.constant 0 : i32
    %c0_i32_0 = arith.constant 0 : i32
    return %arg0, %arg1, %c0_i32 : i32, i32, i32
  }
  func.func @transform_1(%arg0: i32, %arg1: i32) -> (i32, i32, i32) {
    %c0_i32 = arith.constant 0 : i32
    %c0_i32_0 = arith.constant 0 : i32
    %c0_i32_1 = arith.constant 0 : i32
    return %arg0, %c0_i32, %c0_i32_0 : i32, i32, i32
  }
  func.func @transform_2(%arg0: i32, %arg1: i32) -> (i32, i32, i32) {
    %c0_i32 = arith.constant 0 : i32
    %c0_i32_0 = arith.constant 0 : i32
    return %arg0, %arg1, %c0_i32 : i32, i32, i32
  }
  func.func @transform_3(%arg0: i32, %arg1: i32) -> (i32, i32, i32) {
    %c0_i32 = arith.constant 0 : i32
    %c0_i32_0 = arith.constant 0 : i32
    return %arg0, %arg1, %c0_i32 : i32, i32, i32
  }
}

</mosaic_0001>

<llo_original>
// kernel: tpu_custom_call.1
$region0: #{tpu_custom_call.1}
  #allocation0 [shape = 'u32[]', space=smem, size = 0x4, offset = 0x4, fixed_abs, tag = 'smem constant byte address 0x4 - core index']
  #allocation1 [shape = 'u32[144,128]{1,0:T(1,128)}', space=vmem, size = 0x12000, scoped, tag = 'internal scratch']
  %s0 = inlined_call_operand.hbm [shape: f32[2,8,32], index: 0, kind: input, shape index: {}]
  %s1 = inlined_call_operand.vmem [shape: f32[2,1,32], index: 1, kind: input, shape index: {}]
  %s2 = inlined_call_operand.hbm [shape: f32[2,8,32], index: 2, kind: input, shape index: {}]
  %s3 = inlined_call_operand.hbm [shape: f32[2,8], index: 3, kind: output, shape index: {}]
  %s4 = sld [smem:[#allocation0]]
  $region30: #{tpu_custom_call.1} parent=0
    _
  %s6 = ssub.s32 1, %s4
  %s7 = scalar_select 0, %s6, %s4
  $region1: #{tpu_custom_call.1} parent=0
    #allocation2 [shape = 'u8[8192]{0}', space=vmem, size = 0x2000, scoped, tag = 'input window, operand 0, single buffered']
    #allocation3 [shape = 's32[1]{0}', space=sflag, size = 0x4, scoped, tag = 'scoped memory for tpu_custom_call.1']
    #allocation4 [shape = 's32[1]{0}', space=sflag, size = 0x4, scoped, tag = 'scoped memory for tpu_custom_call.1']
    #allocation5 [shape = 'u8[8192]{0}', space=vmem, size = 0x2000, scoped, tag = 'input window, operand 2, single buffered']
    #allocation6 [shape = 's32[1]{0}', space=sflag, size = 0x4, scoped, tag = 'scoped memory for tpu_custom_call.1']
    #allocation7 [shape = 'u8[1024]{0}', space=vmem, size = 0x400, scoped, tag = 'output window, operand 0, single buffered']
    %8 = vsyncpa [#allocation3], 0
    %9 = vsyncpa [#allocation6], 0
    %10 = vsyncpa [#allocation4], 0
    // Predicated region
    $region2: #{tpu_custom_call.1} parent=1 // pred_check
      _
    $region3: #{tpu_custom_call.1} parent=1 // pred_check_branch
      %12 = sbr.rel (0) target = $region5
    $region4: #{tpu_custom_call.1} parent=1 // pred_region
      %s14 = ssub.s32 256, 256
      %15 = vsyncadd [#allocation3], %s14
      %s16 = sshll.u32 [#allocation2], 4
      %s17 = int_to_ptr.vmem [resolvable:$true] %s16
      %22 = dma.hbm_to_vmem [thread:$0]  %s0, 256, %s17, [#allocation3], 128, 128, 8
    $region5: #{tpu_custom_call.1} parent=1 // pred_fallthru
      _
    // Predicated region
    $region6: #{tpu_custom_call.1} parent=1 // pred_check
      _
    $region7: #{tpu_custom_call.1} parent=1 // pred_check_branch
      %24 = sbr.rel (0) target = $region9
    $region8: #{tpu_custom_call.1} parent=1 // pred_region
      _
    $region9: #{tpu_custom_call.1} parent=1 // pred_fallthru
      _
    // Predicated region
    $region10: #{tpu_custom_call.1} parent=1 // pred_check
      _
    $region11: #{tpu_custom_call.1} parent=1 // pred_check_branch
      %26 = sbr.rel (0) target = $region13
    $region12: #{tpu_custom_call.1} parent=1 // pred_region
      %s28 = ssub.s32 256, 256
      %29 = vsyncadd [#allocation6], %s28
      %s30 = sshll.u32 [#allocation5], 4
      %s31 = int_to_ptr.vmem [resolvable:$true] %s30
      %36 = dma.hbm_to_vmem [thread:$0]  %s2, 256, %s31, [#allocation6], 128, 128, 8
    $region13: #{tpu_custom_call.1} parent=1 // pred_fallthru
      _
    // Predicated region
    $region14: #{tpu_custom_call.1} parent=1 // pred_check
      _
    $region15: #{tpu_custom_call.1} parent=1 // pred_check_branch
      %38 = sbr.rel (0) target = $region17
    $region16: #{tpu_custom_call.1} parent=1 // pred_region
      %39 = dma.done [#allocation3], 256
    $region17: #{tpu_custom_call.1} parent=1 // pred_fallthru
      _
    // Predicated region
    $region18: #{tpu_custom_call.1} parent=1 // pred_check
      _
    $region19: #{tpu_custom_call.1} parent=1 // pred_check_branch
      %41 = sbr.rel (0) target = $region21
    $region20: #{tpu_custom_call.1} parent=1 // pred_region
      %42 = dma.done [#allocation6], 256
    $region21: #{tpu_custom_call.1} parent=1 // pred_fallthru
      _
    %v43 = vld [vmem:[#allocation2] sm:$0xff]
    %v44 = vld [vmem:[#allocation2 + $0x8] sm:$0xff]
    %v45 = vld [vmem:[%s1] sm:$0x1]
    %v46 = vld [vmem:[%s1 + $0x1] sm:$0x1]
    %v49 = vlaneseq
    %v50 = vshrl.u32 %v49, 7
    %v51 = vsub.s32 0, %v50
    %v52 = vrot.slane %v45, %v51
    %v53 = vlaneseq
    %v54 = vshrl.u32 %v53, 7
    %v55 = vsub.s32 0, %v54
    %v56 = vrot.slane %v46, %v55
    %v59 = vadd.f32 %v43, %v52
    %v60 = vadd.f32 %v44, %v56
    %v61 = vld [vmem:[#allocation5] sm:$0xff]
    %v62 = vld [vmem:[#allocation5 + $0x8] sm:$0xff]
    %v63 = vsub.f32 %v59, %v61
    %v64 = vsub.f32 %v60, %v62
    %v65 = vmul.f32 %v63, %v63
    %v66 = vmul.f32 %v64, %v64
    %vm67 = vcmask 261120
    %v68 = vsel %vm67, %v65, 0.0
    %69 = vadd.xlane.f32.xlu0 %v68
    %v70 = vpop.xlane.xlu0 %69
    %v71 = vsel %vm67, %v66, 0.0
    %72 = vadd.xlane.f32.xlu0 %v71
    %v73 = vpop.xlane.xlu0 %72
    %v74 = vrsqrt.pop %v70
    %v75 = vmul.f32 %v70, %v74
    %vm76 = vcmp.eq.f32.partialorder %v70, inf
    %v77 = vsel %vm76, %v70, %v75
    %vm78 = vcmp.eq.f32.partialorder %v70, 0.0
    %v79 = vand.u32 %v70, 2147483648
    %v80 = vsel %vm78, %v79, %v77
    %v81 = vrsqrt.pop %v73
    %v82 = vmul.f32 %v73, %v81
    %vm83 = vcmp.eq.f32.partialorder %v73, inf
    %v84 = vsel %vm83, %v73, %v82
    %vm85 = vcmp.eq.f32.partialorder %v73, 0.0
    %v86 = vand.u32 %v73, 2147483648
    %v87 = vsel %vm85, %v86, %v84
    %v88 = vsub.f32 0.0, %v80
    %v89 = vsub.f32 0.0, %v87
    %v92 = vlaneseq
    %v93 = vand.u32 %v92, 127
    %v94 = vlaneseq
    %v95 = vshrl.u32 %v94, 7
    %v96 = vsub.s32 %v93, %v95
    %v97 = vrot.slane %v88, %v96
    %v98 = vlaneseq
    %v99 = vshrl.u32 %v98, 7
    %v100 = vsub.s32 %v93, %v99
    %v101 = vrot.slane %v89, %v100
    %vm102 = vcmask 1041409
    %v103 = vsel %vm102, %v101, %v97
    %vm105 = vcmask 58368
    %106 = vst.msk [vmem:[#allocation7] sm:$0x3] %vm105, %v103
    // Predicated region
    $region22: #{tpu_custom_call.1} parent=1 // pred_check
      _
    $region23: #{tpu_custom_call.1} parent=1 // pred_check_branch
      %108 = sbr.rel (0) target = $region25
    $region24: #{tpu_custom_call.1} parent=1 // pred_region
      %s110 = ssub.s32 32, 32
      %111 = vsyncadd [#allocation4], %s110
      %s113 = sshll.u32 [#allocation7], 4
      %s114 = int_to_ptr.vmem [resolvable:$true] %s113
      %116 = dma.vmem_to_hbm [thread:$0]  %s114, 32, %s3, [#allocation4]
    $region25: #{tpu_custom_call.1} parent=1 // pred_fallthru
      _
    // Predicated region
    $region26: #{tpu_custom_call.1} parent=1 // pred_check
      _
    $region27: #{tpu_custom_call.1} parent=1 // pred_check_branch
      %118 = sbr.rel (0) target = $region29
    $region28: #{tpu_custom_call.1} parent=1 // pred_region
      %119 = dma.done [#allocation4], 32
    $region29: #{tpu_custom_call.1} parent=1 // pred_fallthru
      _
    %120 = vsyncpa [#allocation3], 1
    %121 = vsyncpa [#allocation6], 1
    %122 = vsyncpa [#allocation4], 1

// kernel: tpu_custom_call.1
$region0: #{tpu_custom_call.1}
  #allocation0 [shape = 'u32[]', space=smem, size = 0x4, offset = 0x4, fixed_abs, tag = 'smem constant byte address 0x4 - core index']
  #allocation1 [shape = 'u32[144,128]{1,0:T(1,128)}', space=vmem, size = 0x12000, scoped, tag = 'internal scratch']
  %s0 = inlined_call_operand.hbm [shape: f32[2,8,32], index: 0, kind: input, shape index: {}]
  %s1 = inlined_call_operand.vmem [shape: f32[2,1,32], index: 1, kind: input, shape index: {}]
  %s2 = inlined_call_operand.hbm [shape: f32[2,8,32], index: 2, kind: input, shape index: {}]
  %s3 = inlined_call_operand.vmem [shape: f32[2,8,1], index: 3, kind: output, shape index: {}]
  %s4 = sld [smem:[#allocation0]]
  $region30: #{tpu_custom_call.1} parent=0
    _
  %s6 = ssub.s32 1, %s4
  %s7 = scalar_select 0, %s6, %s4
  $region1: #{tpu_custom_call.1} parent=0
    #allocation2 [shape = 'u8[8192]{0}', space=vmem, size = 0x2000, scoped, tag = 'input window, operand 0, single buffered']
    #allocation3 [shape = 's32[1]{0}', space=sflag, size = 0x4, scoped, tag = 'scoped memory for tpu_custom_call.1']
    #allocation4 [shape = 'u8[8192]{0}', space=vmem, size = 0x2000, scoped, tag = 'input window, operand 2, single buffered']
    #allocation5 [shape = 's32[1]{0}', space=sflag, size = 0x4, scoped, tag = 'scoped memory for tpu_custom_call.1']
    %8 = vsyncpa [#allocation3], 0
    %9 = vsyncpa [#allocation5], 0
    // Predicated region
    $region2: #{tpu_custom_call.1} parent=1 // pred_check
      _
    $region3: #{tpu_custom_call.1} parent=1 // pred_check_branch
      %11 = sbr.rel (0) target = $region5
    $region4: #{tpu_custom_call.1} parent=1 // pred_region
      %s13 = ssub.s32 256, 256
      %14 = vsyncadd [#allocation3], %s13
      %s15 = sshll.u32 [#allocation2], 4
      %s16 = int_to_ptr.vmem [resolvable:$true] %s15
      %21 = dma.hbm_to_vmem [thread:$0]  %s0, 256, %s16, [#allocation3], 128, 128, 8
    $region5: #{tpu_custom_call.1} parent=1 // pred_fallthru
      _
    // Predicated region
    $region6: #{tpu_custom_call.1} parent=1 // pred_check
      _
    $region7: #{tpu_custom_call.1} parent=1 // pred_check_branch
      %23 = sbr.rel (0) target = $region9
    $region8: #{tpu_custom_call.1} parent=1 // pred_region
      _
    $region9: #{tpu_custom_call.1} parent=1 // pred_fallthru
      _
    // Predicated region
    $region10: #{tpu_custom_call.1} parent=1 // pred_check
      _
    $region11: #{tpu_custom_call.1} parent=1 // pred_check_branch
      %25 = sbr.rel (0) target = $region13
    $region12: #{tpu_custom_call.1} parent=1 // pred_region
      %s27 = ssub.s32 256, 256
      %28 = vsyncadd [#allocation5], %s27
      %s29 = sshll.u32 [#allocation4], 4
      %s30 = int_to_ptr.vmem [resolvable:$true] %s29
      %35 = dma.hbm_to_vmem [thread:$0]  %s2, 256, %s30, [#allocation5], 128, 128, 8
    $region13: #{tpu_custom_call.1} parent=1 // pred_fallthru
      _
    // Predicated region
    $region14: #{tpu_custom_call.1} parent=1 // pred_check
      _
    $region15: #{tpu_custom_call.1} parent=1 // pred_check_branch
      %37 = sbr.rel (0) target = $region17
    $region16: #{tpu_custom_call.1} parent=1 // pred_region
      %38 = dma.done [#allocation3], 256
    $region17: #{tpu_custom_call.1} parent=1 // pred_fallthru
      _
    // Predicated region
    $region18: #{tpu_custom_call.1} parent=1 // pred_check
      _
    $region19: #{tpu_custom_call.1} parent=1 // pred_check_branch
      %40 = sbr.rel (0) target = $region21
    $region20: #{tpu_custom_call.1} parent=1 // pred_region
      %41 = dma.done [#allocation5], 256
    $region21: #{tpu_custom_call.1} parent=1 // pred_fallthru
      _
    %v42 = vld [vmem:[#allocation2] sm:$0xff]
    %v43 = vld [vmem:[#allocation2 + $0x8] sm:$0xff]
    %v44 = vld [vmem:[%s1] sm:$0x1]
    %v45 = vld [vmem:[%s1 + $0x1] sm:$0x1]
    %v48 = vlaneseq
    %v49 = vshrl.u32 %v48, 7
    %v50 = vsub.s32 0, %v49
    %v51 = vrot.slane %v44, %v50
    %v52 = vlaneseq
    %v53 = vshrl.u32 %v52, 7
    %v54 = vsub.s32 0, %v53
    %v55 = vrot.slane %v45, %v54
    %v58 = vadd.f32 %v42, %v51
    %v59 = vadd.f32 %v43, %v55
    %v60 = vld [vmem:[#allocation4] sm:$0xff]
    %v61 = vld [vmem:[#allocation4 + $0x8] sm:$0xff]
    %v62 = vsub.f32 %v58, %v60
    %v63 = vsub.f32 %v59, %v61
    %v64 = vmul.f32 %v62, %v62
    %v65 = vmul.f32 %v63, %v63
    %vm66 = vcmask 261120
    %v67 = vsel %vm66, %v64, 0.0
    %68 = vadd.xlane.f32.xlu0 %v67
    %v69 = vpop.xlane.xlu0 %68
    %v70 = vsel %vm66, %v65, 0.0
    %71 = vadd.xlane.f32.xlu0 %v70
    %v72 = vpop.xlane.xlu0 %71
    %v73 = vrsqrt.pop %v69
    %v74 = vmul.f32 %v69, %v73
    %vm75 = vcmp.eq.f32.partialorder %v69, inf
    %v76 = vsel %vm75, %v69, %v74
    %vm77 = vcmp.eq.f32.partialorder %v69, 0.0
    %v78 = vand.u32 %v69, 2147483648
    %v79 = vsel %vm77, %v78, %v76
    %v80 = vrsqrt.pop %v72
    %v81 = vmul.f32 %v72, %v80
    %vm82 = vcmp.eq.f32.partialorder %v72, inf
    %v83 = vsel %vm82, %v72, %v81
    %vm84 = vcmp.eq.f32.partialorder %v72, 0.0
    %v85 = vand.u32 %v72, 2147483648
    %v86 = vsel %vm84, %v85, %v83
    %v87 = vsub.f32 0.0, %v79
    %v88 = vsub.f32 0.0, %v86
    %vm89 = vcmask 7168
    %90 = vst.msk [vmem:[%s3] sm:$0xff] %vm89, %v87
    %91 = vst.msk [vmem:[%s3 + $0x8] sm:$0xff] %vm89, %v88
    // Predicated region
    $region22: #{tpu_custom_call.1} parent=1 // pred_check
      _
    $region23: #{tpu_custom_call.1} parent=1 // pred_check_branch
      %93 = sbr.rel (0) target = $region25
    $region24: #{tpu_custom_call.1} parent=1 // pred_region
      _
    $region25: #{tpu_custom_call.1} parent=1 // pred_fallthru
      _
    // Predicated region
    $region26: #{tpu_custom_call.1} parent=1 // pred_check
      _
    $region27: #{tpu_custom_call.1} parent=1 // pred_check_branch
      %95 = sbr.rel (0) target = $region29
    $region28: #{tpu_custom_call.1} parent=1 // pred_region
      _
    $region29: #{tpu_custom_call.1} parent=1 // pred_fallthru
      _
    %96 = vsyncpa [#allocation3], 1
    %97 = vsyncpa [#allocation5], 1

</llo_original>
